<compile_context>
chip_gen: v6e
topology: v6e:2x2x1
jax: 0.10.0
libtpu: 0.0.40
codegen_flags: <defaults>
</compile_context>

<pallas_src>
import functools

import jax
import jax.numpy as jnp
from jax import lax
from jax.experimental import pallas as pl
from jax.experimental.pallas import tpu as pltpu


_HALF_LOG_2PI = 0.9189385332046727  # 0.5 * log(2*pi)


def _lgamma(z):
    """lgamma(z) for z > 0: 4-step recurrence + Stirling series.

    lgamma(z) = lgamma(z+4) - log(z (z+1) (z+2) (z+3)); lgamma(w) for w >= 4
    via Stirling with 1/(12w) - 1/(360 w^3) corrections (abs err < ~1e-6,
    plenty for f32).  The internal product ~ z^4 stays finite in f32 up to
    z ~ 4e9 (vs ~3e5 for the old degree-7 rational denominator).
    Cost: ~17 VALU + 2 logs + 1 approx-reciprocal (EUP) per call; the approx
    reciprocal only feeds the small correction term, so its ~1e-3 relative
    error contributes < ~2e-5 absolute.
    """
    z1 = z + 1.0
    z2 = z + 2.0
    z3 = z + 3.0
    w = z + 4.0
    prod = (z * z1) * (z2 * z3)
    r = pl.reciprocal(w, approx=True)
    r2 = r * r
    corr = r * (1.0 / 12.0 - r2 * (1.0 / 360.0))
    stirling = (w - 0.5) * jnp.log(w) - w + _HALF_LOG_2PI + corr
    return stirling - jnp.log(prod)


def _nb_loss_kernel(yhat_ref, y_ref, out_ref, *, d, n_rows, block_rows, eps,
                    fold_lanes, partial_rows):
    # mu / theta are static in-kernel slices of the full-width yhat block
    # (no wrapper-side split/pad copies; unaligned d only costs XLU shifts).
    mu = yhat_ref[:, 0:d].astype(jnp.float32)
    theta = yhat_ref[:, d:2 * d].astype(jnp.float32)
    y = y_ref[...].astype(jnp.float32)

    theta_eps = theta + eps
    log_theta_eps = jnp.log(theta_eps)

    t1 = _lgamma(theta_eps) + _lgamma(y + 1.0) - _lgamma(y + theta_eps)
    # log(1 + mu/(theta+eps)) == log(mu+theta+eps) - log(theta+eps):
    # removes one divide and reuses log(theta+eps).
    t2 = (theta + y) * (jnp.log(mu + theta_eps) - log_theta_eps) + y * (
        log_theta_eps - jnp.log(mu + eps))
    final = t1 + t2
    final = jnp.where(jnp.isnan(final), jnp.inf, final)  # _nan2inf

    def _store(x):
        if fold_lanes:
            # Rows-only reduction, then fold 128-lane groups: lane-dense
            # (1, 128) partials, no cross-lane scalar reduce / broadcast.
            rowsum = jnp.sum(x, axis=0, keepdims=True)      # (1, d)
            acc = rowsum[:, 0:128]
            for g in range(1, d // 128):
                acc = acc + rowsum[:, g * 128:(g + 1) * 128]
            out_ref[...] = acc
        else:
            # Unaligned D: scalar partial, broadcast across the 128-lane tile.
            out_ref[...] = jnp.broadcast_to(jnp.sum(x, keepdims=True),
                                            out_ref.shape)

    if partial_rows:
        i = pl.program_id(0)
        last = pl.num_programs(0) - 1

        @pl.when(i != last)
        def _():
            _store(final)                     # full chunks: zero masking cost

        @pl.when(i == last)
        def _():
            rows = lax.broadcasted_iota(jnp.int32, final.shape, 0) \
                + i * block_rows
            _store(jnp.where(rows < n_rows, final, 0.0))
    else:
        _store(final)


def _round_up(a, m):
    return (a + m - 1) // m * m


def nb_loss(yhat, y, eps=1e-8, block_rows=None,
            vmem_budget_bytes=12 * 1024 * 1024):
    """Pallas implementation of NBLoss.forward(yhat, y).

    yhat: (N, 2*D) with means in [:, :D] and dispersions in [:, D:2*D].
    y:    (N, D) targets.  Returns the scalar mean NB negative log-likelihood.
    Any float dtype is accepted (e.g. bf16); compute is f32 in-kernel.
    """
    n, two_d = yhat.shape
    d = two_d // 2
    assert y.shape == (n, d), (y.shape, (n, d))
    # Note: the PyTorch `theta.ndimension() == 1` branch can only trigger for
    # 1-D yhat, which this 2-D wrapper does not accept.

    # Generation-aware VMEM budget (v7x has only 64 MiB physical VMEM).
    try:
        cap = getattr(pltpu.get_tpu_info(), "vmem_capacity_bytes", None)
        if cap:
            vmem_budget_bytes = min(vmem_budget_bytes, cap // 4)
    except Exception:
        pass  # not on TPU / info unavailable: keep the static budget

    if block_rows is None:
        # Big tiles so the ~0.35us/step overhead vanishes, but (a) double-
        # buffered inputs stay inside the VMEM budget and (b) the grid keeps
        # >= 4 chunks once the batch has >= 32 rows, so v7x's second
        # TensorCore has work and the DMA prologue is hidden on v5e/v6e.
        bytes_per_row = 2 * (2 * d * yhat.dtype.itemsize + d * y.dtype.itemsize)
        vmem_cap = max(8, vmem_budget_bytes // bytes_per_row // 8 * 8)
        chunk_cap = _round_up(pl.cdiv(n, 4), 8)
        block_rows = max(8, min(1024, vmem_cap, chunk_cap))
    block_rows = max(8, _round_up(block_rows, 8))
    block_rows = min(block_rows, _round_up(n, 8))
    num_chunks = pl.cdiv(n, block_rows)

    fold_lanes = (d % 128 == 0)
    partial_rows = (n % block_rows != 0)

    kernel = functools.partial(
        _nb_loss_kernel, d=d, n_rows=n, block_rows=block_rows, eps=float(eps),
        fold_lanes=fold_lanes, partial_rows=partial_rows)

    partials = pl.pallas_call(
        kernel,
        out_shape=jax.ShapeDtypeStruct((1, num_chunks * 128), jnp.float32),
        grid_spec=pltpu.PrefetchScalarGridSpec(
            num_scalar_prefetch=0,
            grid=(num_chunks,),
            in_specs=[
                # yhat passed once with the full feature width (legal block:
                # last dim == full array dim); mu/theta sliced in-kernel.
                pl.BlockSpec((block_rows, 2 * d), lambda i: (i, 0)),
                pl.BlockSpec((block_rows, d), lambda i: (i, 0)),
            ],
            # Lane-dense (1, 128) per-chunk partials; every grid step owns its
            # own output block, so the row axis is truly "parallel".
            out_specs=pl.BlockSpec((1, 128), lambda i: (0, i)),
        ),
        compiler_params=pltpu.CompilerParams(
            dimension_semantics=("parallel",),
            vmem_limit_bytes=32 * 1024 * 1024,
        ),
    )(yhat, y)

    partials = partials.reshape(num_chunks, 128)
    total = jnp.sum(partials) if fold_lanes else jnp.sum(partials[:, 0])
    return total / (n * d)


# ---------------------------------------------------------------------------
# Pure-JAX reference (uses gammaln) for a sanity check.
# ---------------------------------------------------------------------------
def nb_loss_ref(yhat, y, eps=1e-8):
    from jax.scipy.special import gammaln

    d = yhat.shape[1] // 2
    mu = yhat[:, :d]
    theta = yhat[:, d:]
    t1 = gammaln(theta + eps) + gammaln(y + 1.0) - gammaln(y + theta + eps)
    t2 = (theta + y) * jnp.log(1.0 + mu / (theta + eps)) + y * (
        jnp.log(theta + eps) - jnp.log(mu + eps))
    final = t1 + t2
    final = jnp.where(jnp.isnan(final), jnp.inf, final)
    return jnp.mean(final)


def _check(loss, ref, name):
    assert jnp.isfinite(loss), f"{name}: non-finite loss: {loss}"
    assert abs(float(loss) - float(ref)) <= 2e-3 * (1.0 + abs(float(ref))), (
        f"{name}: mismatch: pallas={float(loss)} ref={float(ref)}")


if __name__ == "__main__":
    # Case 1: lane-aligned D, 4 parallel chunks, lane-group-fold output path.
    n1, d1 = 32, 256
    k_mu, k_th, k_y = jax.random.split(jax.random.PRNGKey(0), 3)
    mu1 = jax.random.uniform(k_mu, (n1, d1), jnp.float32, 0.1, 5.0)
    th1 = jax.random.uniform(k_th, (n1, d1), jnp.float32, 0.1, 5.0)
    yhat1 = jnp.concatenate([mu1, th1], axis=1)   # (n, 2d): means | dispersions
    y1 = jnp.floor(jax.random.uniform(k_y, (n1, d1), jnp.float32, 0.0, 10.0))
    loss1 = jax.block_until_ready(nb_loss(yhat1, y1))
    ref1 = jax.block_until_ready(nb_loss_ref(yhat1, y1))
    _check(loss1, ref1, "aligned")

    # Case 2: unaligned D (in-kernel mu/theta lane slicing, no pad copies) and
    # a partial last row chunk (row mask only on the last grid step).
    n2, d2 = 20, 100
    k_mu2, k_th2, k_y2 = jax.random.split(jax.random.PRNGKey(1), 3)
    mu2 = jax.random.uniform(k_mu2, (n2, d2), jnp.float32, 0.1, 5.0)
    th2 = jax.random.uniform(k_th2, (n2, d2), jnp.float32, 0.1, 5.0)
    yhat2 = jnp.concatenate([mu2, th2], axis=1)
    y2 = jnp.floor(jax.random.uniform(k_y2, (n2, d2), jnp.float32, 0.0, 50.0))
    loss2 = jax.block_until_ready(nb_loss(yhat2, y2, block_rows=8))
    ref2 = jax.block_until_ready(nb_loss_ref(yhat2, y2))
    _check(loss2, ref2, "unaligned")

    # Case 3: bf16 inputs (f32 compute in-kernel), aligned D with a partial
    # last chunk so the masked branch of the fold path is exercised.
    n3, d3 = 20, 128
    k_mu3, k_th3, k_y3 = jax.random.split(jax.random.PRNGKey(2), 3)
    mu3 = jax.random.uniform(k_mu3, (n3, d3), jnp.float32, 0.1, 5.0)
    th3 = jax.random.uniform(k_th3, (n3, d3), jnp.float32, 0.1, 5.0)
    y3 = jnp.floor(jax.random.uniform(k_y3, (n3, d3), jnp.float32, 0.0, 20.0))
    yhat3 = jnp.concatenate([mu3, th3], axis=1).astype(jnp.bfloat16)
    y3 = y3.astype(jnp.bfloat16)
    loss3 = jax.block_until_ready(nb_loss(yhat3, y3))
    ref3 = jax.block_until_ready(
        nb_loss_ref(yhat3.astype(jnp.float32), y3.astype(jnp.float32)))
    _check(loss3, ref3, "bf16")

    print("KERNEL_OK")
</pallas_src>

<mosaic_0001>
module attributes {stable_mosaic.version = 11 : i64} {
  func.func @_nb_loss_kernel(%arg0: i32, %arg1: memref<8x512xf32, #tpu.memory_space<vmem>>, %arg2: memref<8x256xf32, #tpu.memory_space<vmem>>, %arg3: memref<1x128xf32, #tpu.memory_space<vmem>>) attributes {dimension_semantics = [#tpu.dimension_semantics<parallel>], iteration_bounds = array<i64: 4>, scalar_prefetch = 0 : i64, scratch_operands = 0 : i64, tpu.core_type = #tpu.core_type<tc>, window_params = [{transform_indices = @transform_0, window_bounds = array<i64: 8, 512>}, {transform_indices = @transform_1, window_bounds = array<i64: 8, 256>}, {transform_indices = @transform_2, window_bounds = array<i64: 1, 128>}]} {
    %c0 = arith.constant 0 : index
    %c0_0 = arith.constant 0 : index
    %0 = vector.load %arg1[%c0, %c0_0] : memref<8x512xf32, #tpu.memory_space<vmem>>, vector<8x256xf32>
    %c0_1 = arith.constant 0 : index
    %c256 = arith.constant 256 : index
    %1 = vector.load %arg1[%c0_1, %c256] : memref<8x512xf32, #tpu.memory_space<vmem>>, vector<8x256xf32>
    %c0_2 = arith.constant 0 : index
    %c0_3 = arith.constant 0 : index
    %2 = vector.load %arg2[%c0_2, %c0_3] : memref<8x256xf32, #tpu.memory_space<vmem>>, vector<8x256xf32>
    %cst = arith.constant 9.99999993E-9 : f32
    %3 = vector.broadcast %cst : f32 to vector<8x256xf32>
    %4 = arith.addf %1, %3 : vector<8x256xf32>
    %5 = math.log %4 : vector<8x256xf32>
    %cst_4 = arith.constant 1.000000e+00 : f32
    %6 = vector.broadcast %cst_4 : f32 to vector<8x256xf32>
    %7 = arith.addf %4, %6 : vector<8x256xf32>
    %cst_5 = arith.constant 2.000000e+00 : f32
    %8 = vector.broadcast %cst_5 : f32 to vector<8x256xf32>
    %9 = arith.addf %4, %8 : vector<8x256xf32>
    %cst_6 = arith.constant 3.000000e+00 : f32
    %10 = vector.broadcast %cst_6 : f32 to vector<8x256xf32>
    %11 = arith.addf %4, %10 : vector<8x256xf32>
    %cst_7 = arith.constant 4.000000e+00 : f32
    %12 = vector.broadcast %cst_7 : f32 to vector<8x256xf32>
    %13 = arith.addf %4, %12 : vector<8x256xf32>
    %14 = arith.mulf %4, %7 : vector<8x256xf32>
    %15 = arith.mulf %9, %11 : vector<8x256xf32>
    %16 = arith.mulf %14, %15 : vector<8x256xf32>
    %17 = tpu.reciprocal %13 {approx = true} : vector<8x256xf32> -> vector<8x256xf32>
    %18 = arith.mulf %17, %17 : vector<8x256xf32>
    %cst_8 = arith.constant 0.00277777785 : f32
    %19 = vector.broadcast %cst_8 : f32 to vector<8x256xf32>
    %20 = arith.mulf %18, %19 : vector<8x256xf32>
    %cst_9 = arith.constant 0.0833333358 : f32
    %21 = vector.broadcast %cst_9 : f32 to vector<8x256xf32>
    %22 = arith.subf %21, %20 : vector<8x256xf32>
    %23 = arith.mulf %17, %22 : vector<8x256xf32>
    %cst_10 = arith.constant 5.000000e-01 : f32
    %24 = vector.broadcast %cst_10 : f32 to vector<8x256xf32>
    %25 = arith.subf %13, %24 : vector<8x256xf32>
    %26 = math.log %13 : vector<8x256xf32>
    %27 = arith.mulf %25, %26 : vector<8x256xf32>
    %28 = arith.subf %27, %13 : vector<8x256xf32>
    %cst_11 = arith.constant 0.918938517 : f32
    %29 = vector.broadcast %cst_11 : f32 to vector<8x256xf32>
    %30 = arith.addf %28, %29 : vector<8x256xf32>
    %31 = arith.addf %30, %23 : vector<8x256xf32>
    %32 = math.log %16 : vector<8x256xf32>
    %33 = arith.subf %31, %32 : vector<8x256xf32>
    %cst_12 = arith.constant 1.000000e+00 : f32
    %34 = vector.broadcast %cst_12 : f32 to vector<8x256xf32>
    %35 = arith.addf %2, %34 : vector<8x256xf32>
    %cst_13 = arith.constant 1.000000e+00 : f32
    %36 = vector.broadcast %cst_13 : f32 to vector<8x256xf32>
    %37 = arith.addf %35, %36 : vector<8x256xf32>
    %cst_14 = arith.constant 2.000000e+00 : f32
    %38 = vector.broadcast %cst_14 : f32 to vector<8x256xf32>
    %39 = arith.addf %35, %38 : vector<8x256xf32>
    %cst_15 = arith.constant 3.000000e+00 : f32
    %40 = vector.broadcast %cst_15 : f32 to vector<8x256xf32>
    %41 = arith.addf %35, %40 : vector<8x256xf32>
    %cst_16 = arith.constant 4.000000e+00 : f32
    %42 = vector.broadcast %cst_16 : f32 to vector<8x256xf32>
    %43 = arith.addf %35, %42 : vector<8x256xf32>
    %44 = arith.mulf %35, %37 : vector<8x256xf32>
    %45 = arith.mulf %39, %41 : vector<8x256xf32>
    %46 = arith.mulf %44, %45 : vector<8x256xf32>
    %47 = tpu.reciprocal %43 {approx = true} : vector<8x256xf32> -> vector<8x256xf32>
    %48 = arith.mulf %47, %47 : vector<8x256xf32>
    %cst_17 = arith.constant 0.00277777785 : f32
    %49 = vector.broadcast %cst_17 : f32 to vector<8x256xf32>
    %50 = arith.mulf %48, %49 : vector<8x256xf32>
    %cst_18 = arith.constant 0.0833333358 : f32
    %51 = vector.broadcast %cst_18 : f32 to vector<8x256xf32>
    %52 = arith.subf %51, %50 : vector<8x256xf32>
    %53 = arith.mulf %47, %52 : vector<8x256xf32>
    %cst_19 = arith.constant 5.000000e-01 : f32
    %54 = vector.broadcast %cst_19 : f32 to vector<8x256xf32>
    %55 = arith.subf %43, %54 : vector<8x256xf32>
    %56 = math.log %43 : vector<8x256xf32>
    %57 = arith.mulf %55, %56 : vector<8x256xf32>
    %58 = arith.subf %57, %43 : vector<8x256xf32>
    %cst_20 = arith.constant 0.918938517 : f32
    %59 = vector.broadcast %cst_20 : f32 to vector<8x256xf32>
    %60 = arith.addf %58, %59 : vector<8x256xf32>
    %61 = arith.addf %60, %53 : vector<8x256xf32>
    %62 = math.log %46 : vector<8x256xf32>
    %63 = arith.subf %61, %62 : vector<8x256xf32>
    %64 = arith.addf %33, %63 : vector<8x256xf32>
    %65 = arith.addf %2, %4 : vector<8x256xf32>
    %cst_21 = arith.constant 1.000000e+00 : f32
    %66 = vector.broadcast %cst_21 : f32 to vector<8x256xf32>
    %67 = arith.addf %65, %66 : vector<8x256xf32>
    %cst_22 = arith.constant 2.000000e+00 : f32
    %68 = vector.broadcast %cst_22 : f32 to vector<8x256xf32>
    %69 = arith.addf %65, %68 : vector<8x256xf32>
    %cst_23 = arith.constant 3.000000e+00 : f32
    %70 = vector.broadcast %cst_23 : f32 to vector<8x256xf32>
    %71 = arith.addf %65, %70 : vector<8x256xf32>
    %cst_24 = arith.constant 4.000000e+00 : f32
    %72 = vector.broadcast %cst_24 : f32 to vector<8x256xf32>
    %73 = arith.addf %65, %72 : vector<8x256xf32>
    %74 = arith.mulf %65, %67 : vector<8x256xf32>
    %75 = arith.mulf %69, %71 : vector<8x256xf32>
    %76 = arith.mulf %74, %75 : vector<8x256xf32>
    %77 = tpu.reciprocal %73 {approx = true} : vector<8x256xf32> -> vector<8x256xf32>
    %78 = arith.mulf %77, %77 : vector<8x256xf32>
    %cst_25 = arith.constant 0.00277777785 : f32
    %79 = vector.broadcast %cst_25 : f32 to vector<8x256xf32>
    %80 = arith.mulf %78, %79 : vector<8x256xf32>
    %cst_26 = arith.constant 0.0833333358 : f32
    %81 = vector.broadcast %cst_26 : f32 to vector<8x256xf32>
    %82 = arith.subf %81, %80 : vector<8x256xf32>
    %83 = arith.mulf %77, %82 : vector<8x256xf32>
    %cst_27 = arith.constant 5.000000e-01 : f32
    %84 = vector.broadcast %cst_27 : f32 to vector<8x256xf32>
    %85 = arith.subf %73, %84 : vector<8x256xf32>
    %86 = math.log %73 : vector<8x256xf32>
    %87 = arith.mulf %85, %86 : vector<8x256xf32>
    %88 = arith.subf %87, %73 : vector<8x256xf32>
    %cst_28 = arith.constant 0.918938517 : f32
    %89 = vector.broadcast %cst_28 : f32 to vector<8x256xf32>
    %90 = arith.addf %88, %89 : vector<8x256xf32>
    %91 = arith.addf %90, %83 : vector<8x256xf32>
    %92 = math.log %76 : vector<8x256xf32>
    %93 = arith.subf %91, %92 : vector<8x256xf32>
    %94 = arith.subf %64, %93 : vector<8x256xf32>
    %95 = arith.addf %1, %2 : vector<8x256xf32>
    %96 = arith.addf %0, %4 : vector<8x256xf32>
    %97 = math.log %96 : vector<8x256xf32>
    %98 = arith.subf %97, %5 : vector<8x256xf32>
    %99 = arith.mulf %95, %98 : vector<8x256xf32>
    %cst_29 = arith.constant 9.99999993E-9 : f32
    %100 = vector.broadcast %cst_29 : f32 to vector<8x256xf32>
    %101 = arith.addf %0, %100 : vector<8x256xf32>
    %102 = math.log %101 : vector<8x256xf32>
    %103 = arith.subf %5, %102 : vector<8x256xf32>
    %104 = arith.mulf %2, %103 : vector<8x256xf32>
    %105 = arith.addf %99, %104 : vector<8x256xf32>
    %106 = arith.addf %94, %105 : vector<8x256xf32>
    %107 = arith.cmpf one, %106, %106 : vector<8x256xf32>
    %cst_30 = arith.constant 0x7F800000 : f32
    %108 = vector.broadcast %cst_30 : f32 to vector<8x256xf32>
    %109 = arith.select %107, %108, %106 : vector<8x256xi1>, vector<8x256xf32>
    %cst_31 = arith.constant dense<0.000000e+00> : vector<256xf32>
    %110 = vector.multi_reduction <add>, %109, %cst_31 [0] : vector<8x256xf32> to vector<256xf32>
    %111 = vector.shape_cast %110 : vector<256xf32> to vector<1x256xf32>
    %112 = vector.extract_strided_slice %111 {offsets = [0, 0], sizes = [1, 128], strides = [1, 1]} : vector<1x256xf32> to vector<1x128xf32>
    %113 = vector.extract_strided_slice %111 {offsets = [0, 128], sizes = [1, 128], strides = [1, 1]} : vector<1x256xf32> to vector<1x128xf32>
    %114 = arith.addf %112, %113 : vector<1x128xf32>
    %c0_32 = arith.constant 0 : index
    %c0_33 = arith.constant 0 : index
    %115 = vector.load %arg3[%c0_32, %c0_33] : memref<1x128xf32, #tpu.memory_space<vmem>>, vector<1x128xf32>
    tpu.vector_store %arg3[%c0_32, %c0_33], %114 {strides = array<i32>} : memref<1x128xf32, #tpu.memory_space<vmem>>, vector<1x128xf32>,
    return
  }
  func.func @transform_0(%arg0: i32) -> (i32, i32) {
    %c0_i32 = arith.constant 0 : i32
    %c0_i32_0 = arith.constant 0 : i32
    return %arg0, %c0_i32 : i32, i32
  }
  func.func @transform_1(%arg0: i32) -> (i32, i32) {
    %c0_i32 = arith.constant 0 : i32
    %c0_i32_0 = arith.constant 0 : i32
    return %arg0, %c0_i32 : i32, i32
  }
  func.func @transform_2(%arg0: i32) -> (i32, i32) {
    %c0_i32 = arith.constant 0 : i32
    %c0_i32_0 = arith.constant 0 : i32
    return %c0_i32, %arg0 : i32, i32
  }
}

</mosaic_0001>

<llo_original>
// kernel: tpu_custom_call.1
$region0: #{tpu_custom_call.1}
  #allocation0 [shape = 'u32[]', space=smem, size = 0x4, offset = 0x4, fixed_abs, tag = 'smem constant byte address 0x4 - core index']
  #allocation1 [shape = 'u32[144,128]{1,0:T(1,128)}', space=vmem, size = 0x12000, scoped, tag = 'internal scratch']
  %s0 = inlined_call_operand.hbm [shape: f32[32,512], index: 0, kind: input, shape index: {}]
  %s1 = inlined_call_operand.hbm [shape: f32[32,256], index: 1, kind: input, shape index: {}]
  %s2 = inlined_call_operand.hbm [shape: f32[1,512], index: 2, kind: output, shape index: {}]
  %s3 = sld [smem:[#allocation0]]
  $region49: #{tpu_custom_call.1} parent=0
    _
  %s5 = ssub.s32 1, %s3
  %s6 = scalar_select 0, %s5, %s3
  $region1: #{tpu_custom_call.1} parent=0
    #allocation2 [shape = 'u8[32768]{0}', space=vmem, size = 0x8000, scoped, tag = 'input window, operand 0']
    #allocation3 [shape = 's32[2]{0}', space=sflag, size = 0x8, scoped, tag = 'scoped memory for tpu_custom_call.1']
    #allocation4 [shape = 's32[2]{0}', space=sflag, size = 0x8, scoped, tag = 'scoped memory for tpu_custom_call.1']
    #allocation5 [shape = 'u8[16384]{0}', space=vmem, size = 0x4000, scoped, tag = 'input window, operand 1']
    #allocation6 [shape = 's32[2]{0}', space=sflag, size = 0x8, scoped, tag = 'scoped memory for tpu_custom_call.1']
    #allocation7 [shape = 'u8[1024]{0}', space=vmem, size = 0x400, scoped, tag = 'output window, operand 0']
    %7 = vsyncpa [#allocation3], 0
    %s8 = scalar_lea.sflag [#allocation3], 1
    %9 = vsyncpa %s8, 0
    %10 = vsyncpa [#allocation6], 0
    %s11 = scalar_lea.sflag [#allocation6], 1
    %12 = vsyncpa %s11, 0
    %13 = vsyncpa [#allocation4], 0
    %s14 = scalar_lea.sflag [#allocation4], 1
    %15 = vsyncpa %s14, 0
    loop: start=0, step=1, limit=6
    $region2: #{tpu_custom_call.1} parent=1 // loop_pre_header
      _
    $region3: #{tpu_custom_call.1} parent=1 // loop_header
      %s17 = sphi 0, %s21
      %p18 = scmp.ge.s32.totalorder %s17, 6
      %s27 = sphi 0, %s29
      %s30 = sphi 0, %s27
      %s31 = sphi 0, %s30
      %s47 = sphi 0, %s31
      %s53 = sphi 0, %s55
      %s56 = sphi 0, %s53
      %s57 = sphi 0, %s56
      %s73 = sphi 0, %s57
      %s79 = sphi 0, %s81
      %s82 = sphi 0, %s79
      %s83 = sphi 0, %s82
      %s99 = sphi 0, %s83
    $region4: #{tpu_custom_call.1} parent=1 // loop_header_branch
      %20 = sbr.rel (%p18) target = $region8
    $region5: #{tpu_custom_call.1} parent=1 // loop_body
      %s22 = ssub.s32 %s17, 1
      %s23 = ssub.s32 %s17, 2
      %s24 = sadd.s32 %s17, 1
      %s25 = ssub.s32 %s17, %s24
      %p26 = scmp.eq.s32.totalorder %s25, 0
      %s28 = sadd.s32 %s27, 1
      %s29 = scalar_select %p26, %s27, %s28
      %p32 = pneg %p26
      %p33 = scmp.eq.s32.totalorder %s17, 3
      %p34 = por %p32, %p33
      %p35 = scmp.ne.s32.totalorder %s27, %s30
      %p36 = scmp.eq.s32.totalorder %s17, 0
      %p37 = por %p35, %p36
      %p38 = scmp.ne.s32.totalorder %s27, %s30
      %p39 = scmp.eq.s32.totalorder %s22, 3
      %p40 = por %p38, %p39
      %p41 = scmp.ne.s32.totalorder %s30, %s31
      %p42 = scmp.eq.s32.totalorder %s22, 0
      %p43 = por %p41, %p42
      %p44 = scmp.ne.s32.totalorder %s30, %s31
      %p45 = scmp.eq.s32.totalorder %s23, 3
      %p46 = por %p44, %p45
      %p48 = scmp.ne.s32.totalorder %s31, %s47
      %p49 = scmp.eq.s32.totalorder %s23, 0
      %p50 = por %p48, %p49
      %s51 = ssub.s32 %s17, %s24
      %p52 = scmp.eq.s32.totalorder %s51, 0
      %s54 = sadd.s32 %s53, 1
      %s55 = scalar_select %p52, %s53, %s54
      %p58 = pneg %p52
      %p59 = scmp.eq.s32.totalorder %s17, 3
      %p60 = por %p58, %p59
      %p61 = scmp.ne.s32.totalorder %s53, %s56
      %p62 = scmp.eq.s32.totalorder %s17, 0
      %p63 = por %p61, %p62
      %p64 = scmp.ne.s32.totalorder %s53, %s56
      %p65 = scmp.eq.s32.totalorder %s22, 3
      %p66 = por %p64, %p65
      %p67 = scmp.ne.s32.totalorder %s56, %s57
      %p68 = scmp.eq.s32.totalorder %s22, 0
      %p69 = por %p67, %p68
      %p70 = scmp.ne.s32.totalorder %s56, %s57
      %p71 = scmp.eq.s32.totalorder %s23, 3
      %p72 = por %p70, %p71
      %p74 = scmp.ne.s32.totalorder %s57, %s73
      %p75 = scmp.eq.s32.totalorder %s23, 0
      %p76 = por %p74, %p75
      %s77 = ssub.s32 %s17, %s24
      %p78 = scmp.eq.s32.totalorder %s77, 0
      %s80 = sadd.s32 %s79, 1
      %s81 = scalar_select %p78, %s79, %s80
      %p84 = pneg %p78
      %p85 = scmp.eq.s32.totalorder %s17, 3
      %p86 = por %p84, %p85
      %p87 = scmp.ne.s32.totalorder %s79, %s82
      %p88 = scmp.eq.s32.totalorder %s17, 0
      %p89 = por %p87, %p88
      %p90 = scmp.ne.s32.totalorder %s79, %s82
      %p91 = scmp.eq.s32.totalorder %s22, 3
      %p92 = por %p90, %p91
      %p93 = scmp.ne.s32.totalorder %s82, %s83
      %p94 = scmp.eq.s32.totalorder %s22, 0
      %p95 = por %p93, %p94
      %p96 = scmp.ne.s32.totalorder %s82, %s83
      %p97 = scmp.eq.s32.totalorder %s23, 3
      %p98 = por %p96, %p97
      %p100 = scmp.ne.s32.totalorder %s83, %s99
      %p101 = scmp.eq.s32.totalorder %s23, 0
      %p102 = por %p100, %p101
      %p103 = scmp.le.s32.totalorder 1, %s17
      %p104 = scmp.lt.s32.totalorder %s17, 5
      %p105 = pnand %p103, %p104
      %p106 = pneg %p105
      // Predicated region
      $region9: #{tpu_custom_call.1} parent=5 // pred_check
        _
      $region10: #{tpu_custom_call.1} parent=5 // pred_check_branch
        %108 = sbr.rel (%p105) target = $region12
      $region11: #{tpu_custom_call.1} parent=5 // pred_region
        %s109 = ssub.s32 %s17, 1
      $region12: #{tpu_custom_call.1} parent=5 // pred_fallthru
        _
      %p110 = scmp.lt.s32.totalorder %s17, 4
      // Predicated region
      $region13: #{tpu_custom_call.1} parent=5 // pred_check
        %p111 = pneg %p110
      $region14: #{tpu_custom_call.1} parent=5 // pred_check_branch
        %113 = sbr.rel (%p111) target = $region16
      $region15: #{tpu_custom_call.1} parent=5 // pred_region
        // Predicated region
        $region17: #{tpu_custom_call.1} parent=15 // pred_check
          %p114 = pneg %p37
        $region18: #{tpu_custom_call.1} parent=15 // pred_check_branch
          %116 = sbr.rel (%p114) target = $region20
        $region19: #{tpu_custom_call.1} parent=15 // pred_region
          %s117 = sand.u32 %s27, 1
          %s118 = scalar_lea.sflag [#allocation3], %s117
          %s119 = sand.u32 %s27, 1
          %s120 = smul.addr %s119, 32
          %s121 = scalar_lea.vmem [#allocation2], %s120
          %s123 = ssub.s32 512, 512
          %124 = vsyncadd %s118, %s123
          %s125 = smul.addr %s17, 4
          %s126 = smul.addr %s125, 128
          %s127 = scalar_lea.hbm %s0, %s126
          %s129 = sshll.u32 %s121, 4
          %s130 = int_to_ptr.vmem [resolvable:$true] %s129
          %132 = dma.hbm_to_vmem [thread:$0]  %s127, 512, %s130, %s118
        $region20: #{tpu_custom_call.1} parent=15 // pred_fallthru
          _
        // Predicated region
        $region21: #{tpu_custom_call.1} parent=15 // pred_check
          %p133 = pneg %p63
        $region22: #{tpu_custom_call.1} parent=15 // pred_check_branch
          %135 = sbr.rel (%p133) target = $region24
        $region23: #{tpu_custom_call.1} parent=15 // pred_region
          %s136 = sand.u32 %s53, 1
          %s137 = scalar_lea.sflag [#allocation6], %s136
          %s138 = sand.u32 %s53, 1
          %s139 = smul.addr %s138, 16
          %s140 = scalar_lea.vmem [#allocation5], %s139
          %s142 = ssub.s32 256, 256
          %143 = vsyncadd %s137, %s142
          %s144 = smul.addr %s17, 2
          %s145 = smul.addr %s144, 128
          %s146 = scalar_lea.hbm %s1, %s145
          %s148 = sshll.u32 %s140, 4
          %s149 = int_to_ptr.vmem [resolvable:$true] %s148
          %151 = dma.hbm_to_vmem [thread:$0]  %s146, 256, %s149, %s137
        $region24: #{tpu_custom_call.1} parent=15 // pred_fallthru
          _
      $region16: #{tpu_custom_call.1} parent=5 // pred_fallthru
        _
      %p152 = scmp.le.s32.totalorder 1, %s17
      %p153 = scmp.lt.s32.totalorder %s17, 5
      %p154 = pnand %p152, %p153
      %p155 = pneg %p154
      // Predicated region
      $region25: #{tpu_custom_call.1} parent=5 // pred_check
        _
      $region26: #{tpu_custom_call.1} parent=5 // pred_check_branch
        %157 = sbr.rel (%p154) target = $region28
      $region27: #{tpu_custom_call.1} parent=5 // pred_region
        %s158 = ssub.s32 %s17, 1
        %s159 = sand.u32 %s30, 1
        %s160 = scalar_lea.sflag [#allocation3], %s159
        %s161 = sand.u32 %s30, 1
        %s162 = smul.addr %s161, 32
        %s163 = scalar_lea.vmem [#allocation2], %s162
        // Predicated region
        $region29: #{tpu_custom_call.1} parent=27 // pred_check
          %p164 = pneg %p43
        $region30: #{tpu_custom_call.1} parent=27 // pred_check_branch
          %166 = sbr.rel (%p164) target = $region32
        $region31: #{tpu_custom_call.1} parent=27 // pred_region
          %167 = dma.done %s160, 512
        $region32: #{tpu_custom_call.1} parent=27 // pred_fallthru
          _
        %s168 = sand.u32 %s56, 1
        %s169 = scalar_lea.sflag [#allocation6], %s168
        %s170 = sand.u32 %s56, 1
        %s171 = smul.addr %s170, 16
        %s172 = scalar_lea.vmem [#allocation5], %s171
        // Predicated region
        $region33: #{tpu_custom_call.1} parent=27 // pred_check
          %p173 = pneg %p69
        $region34: #{tpu_custom_call.1} parent=27 // pred_check_branch
          %175 = sbr.rel (%p173) target = $region36
        $region35: #{tpu_custom_call.1} parent=27 // pred_region
          %176 = dma.done %s169, 256
        $region36: #{tpu_custom_call.1} parent=27 // pred_fallthru
          _
        %s177 = sand.u32 %s30, 1
        %s178 = scalar_lea.sflag [#allocation3], %s177
        %s179 = sand.u32 %s30, 1
        %s180 = smul.addr %s179, 32
        %s181 = scalar_lea.vmem [#allocation2], %s180
        %p182 = pneg %p43
        %p183 = pneg %p40
        %s184 = sand.u32 %s56, 1
        %s185 = scalar_lea.sflag [#allocation6], %s184
        %s186 = sand.u32 %s56, 1
        %s187 = smul.addr %s186, 16
        %s188 = scalar_lea.vmem [#allocation5], %s187
        %p189 = pneg %p69
        %p190 = pneg %p66
        %p191 = pneg %p95
        %p192 = pneg %p92
        %s193 = sand.u32 %s82, 1
        %s194 = scalar_lea.sflag [#allocation4], %s193
        %s195 = sand.u32 %s82, 1
        %s196 = scalar_lea.vmem [#allocation7], %s195
        %v197 = vld [vmem:[%s163] sm:$0xff]
        %v198 = vld [vmem:[%s163 + $0x8] sm:$0xff]
        %v199 = vld [vmem:[%s163 + $0x10] sm:$0xff]
        %v200 = vld [vmem:[%s163 + $0x18] sm:$0xff]
        %v201 = vld [vmem:[%s172] sm:$0xff]
        %v202 = vld [vmem:[%s172 + $0x8] sm:$0xff]
        %v203 = vadd.f32 %v199, 1e-08
        %v204 = vadd.f32 %v200, 1e-08
        %v205 = vlog2.pop %v203
        %v206 = vmul.f32 %v205, 0.6931472
        %v207 = vlog2.pop %v204
        %v208 = vmul.f32 %v207, 0.6931472
        %v209 = vadd.f32 %v203, 1.0
        %v210 = vadd.f32 %v204, 1.0
        %v211 = vadd.f32 %v203, 2.0
        %v212 = vadd.f32 %v204, 2.0
        %v213 = vadd.f32 %v203, 3.0
        %v214 = vadd.f32 %v204, 3.0
        %v215 = vadd.f32 %v203, 4.0
        %v216 = vadd.f32 %v204, 4.0
        %v217 = vmul.f32 %v203, %v209
        %v218 = vmul.f32 %v204, %v210
        %v219 = vmul.f32 %v211, %v213
        %v220 = vmul.f32 %v212, %v214
        %v221 = vmul.f32 %v217, %v219
        %v222 = vmul.f32 %v218, %v220
        %v223 = vrcp.pop %v215
        %v224 = vrcp.pop %v216
        %v225 = vmul.f32 %v223, %v223
        %v226 = vmul.f32 %v224, %v224
        %v227 = vmul.f32 %v225, 0.0027777778
        %v228 = vmul.f32 %v226, 0.0027777778
        %v229 = vsub.f32 0.083333336, %v227
        %v230 = vsub.f32 0.083333336, %v228
        %v231 = vmul.f32 %v223, %v229
        %v232 = vmul.f32 %v224, %v230
        %v233 = vsub.f32 %v215, 0.5
        %v234 = vsub.f32 %v216, 0.5
        %v235 = vlog2.pop %v215
        %v236 = vmul.f32 %v235, 0.6931472
        %v237 = vlog2.pop %v216
        %v238 = vmul.f32 %v237, 0.6931472
        %v239 = vmul.f32 %v233, %v236
        %v240 = vmul.f32 %v234, %v238
        %v241 = vsub.f32 %v239, %v215
        %v242 = vsub.f32 %v240, %v216
        %v243 = vadd.f32 %v241, 0.9189385
        %v244 = vadd.f32 %v242, 0.9189385
        %v245 = vadd.f32 %v243, %v231
        %v246 = vadd.f32 %v244, %v232
        %v247 = vlog2.pop %v221
        %v248 = vmul.f32 %v247, 0.6931472
        %v249 = vlog2.pop %v222
        %v250 = vmul.f32 %v249, 0.6931472
        %v251 = vsub.f32 %v245, %v248
        %v252 = vsub.f32 %v246, %v250
        %v253 = vadd.f32 %v201, 1.0
        %v254 = vadd.f32 %v202, 1.0
        %v255 = vadd.f32 %v253, 1.0
        %v256 = vadd.f32 %v254, 1.0
        %v257 = vadd.f32 %v253, 2.0
        %v258 = vadd.f32 %v254, 2.0
        %v259 = vadd.f32 %v253, 3.0
        %v260 = vadd.f32 %v254, 3.0
        %v261 = vadd.f32 %v253, 4.0
        %v262 = vadd.f32 %v254, 4.0
        %v263 = vmul.f32 %v253, %v255
        %v264 = vmul.f32 %v254, %v256
        %v265 = vmul.f32 %v257, %v259
        %v266 = vmul.f32 %v258, %v260
        %v267 = vmul.f32 %v263, %v265
        %v268 = vmul.f32 %v264, %v266
        %v269 = vrcp.pop %v261
        %v270 = vrcp.pop %v262
        %v271 = vmul.f32 %v269, %v269
        %v272 = vmul.f32 %v270, %v270
        %v273 = vmul.f32 %v271, 0.0027777778
        %v274 = vmul.f32 %v272, 0.0027777778
        %v275 = vsub.f32 0.083333336, %v273
        %v276 = vsub.f32 0.083333336, %v274
        %v277 = vmul.f32 %v269, %v275
        %v278 = vmul.f32 %v270, %v276
        %v279 = vsub.f32 %v261, 0.5
        %v280 = vsub.f32 %v262, 0.5
        %v281 = vlog2.pop %v261
        %v282 = vmul.f32 %v281, 0.6931472
        %v283 = vlog2.pop %v262
        %v284 = vmul.f32 %v283, 0.6931472
        %v285 = vmul.f32 %v279, %v282
        %v286 = vmul.f32 %v280, %v284
        %v287 = vsub.f32 %v285, %v261
        %v288 = vsub.f32 %v286, %v262
        %v289 = vadd.f32 %v287, 0.9189385
        %v290 = vadd.f32 %v288, 0.9189385
        %v291 = vadd.f32 %v289, %v277
        %v292 = vadd.f32 %v290, %v278
        %v293 = vlog2.pop %v267
        %v294 = vmul.f32 %v293, 0.6931472
        %v295 = vlog2.pop %v268
        %v296 = vmul.f32 %v295, 0.6931472
        %v297 = vsub.f32 %v291, %v294
        %v298 = vsub.f32 %v292, %v296
        %v299 = vadd.f32 %v251, %v297
        %v300 = vadd.f32 %v252, %v298
        %v301 = vadd.f32 %v201, %v203
        %v302 = vadd.f32 %v202, %v204
        %v303 = vadd.f32 %v301, 1.0
        %v304 = vadd.f32 %v302, 1.0
        %v305 = vadd.f32 %v301, 2.0
        %v306 = vadd.f32 %v302, 2.0
        %v307 = vadd.f32 %v301, 3.0
        %v308 = vadd.f32 %v302, 3.0
        %v309 = vadd.f32 %v301, 4.0
        %v310 = vadd.f32 %v302, 4.0
        %v311 = vmul.f32 %v301, %v303
        %v312 = vmul.f32 %v302, %v304
        %v313 = vmul.f32 %v305, %v307
        %v314 = vmul.f32 %v306, %v308
        %v315 = vmul.f32 %v311, %v313
        %v316 = vmul.f32 %v312, %v314
        %v317 = vrcp.pop %v309
        %v318 = vrcp.pop %v310
        %v319 = vmul.f32 %v317, %v317
        %v320 = vmul.f32 %v318, %v318
        %v321 = vmul.f32 %v319, 0.0027777778
        %v322 = vmul.f32 %v320, 0.0027777778
        %v323 = vsub.f32 0.083333336, %v321
        %v324 = vsub.f32 0.083333336, %v322
        %v325 = vmul.f32 %v317, %v323
        %v326 = vmul.f32 %v318, %v324
        %v327 = vsub.f32 %v309, 0.5
        %v328 = vsub.f32 %v310, 0.5
        %v329 = vlog2.pop %v309
        %v330 = vmul.f32 %v329, 0.6931472
        %v331 = vlog2.pop %v310
        %v332 = vmul.f32 %v331, 0.6931472
        %v333 = vmul.f32 %v327, %v330
        %v334 = vmul.f32 %v328, %v332
        %v335 = vsub.f32 %v333, %v309
        %v336 = vsub.f32 %v334, %v310
        %v337 = vadd.f32 %v335, 0.9189385
        %v338 = vadd.f32 %v336, 0.9189385
        %v339 = vadd.f32 %v337, %v325
        %v340 = vadd.f32 %v338, %v326
        %v341 = vlog2.pop %v315
        %v342 = vmul.f32 %v341, 0.6931472
        %v343 = vlog2.pop %v316
        %v344 = vmul.f32 %v343, 0.6931472
        %v345 = vsub.f32 %v339, %v342
        %v346 = vsub.f32 %v340, %v344
        %v347 = vsub.f32 %v299, %v345
        %v348 = vsub.f32 %v300, %v346
        %v349 = vadd.f32 %v199, %v201
        %v350 = vadd.f32 %v200, %v202
        %v351 = vadd.f32 %v197, %v203
        %v352 = vadd.f32 %v198, %v204
        %v353 = vlog2.pop %v351
        %v354 = vmul.f32 %v353, 0.6931472
        %v355 = vlog2.pop %v352
        %v356 = vmul.f32 %v355, 0.6931472
        %v357 = vsub.f32 %v354, %v206
        %v358 = vsub.f32 %v356, %v208
        %v359 = vmul.f32 %v349, %v357
        %v360 = vmul.f32 %v350, %v358
        %v361 = vadd.f32 %v197, 1e-08
        %v362 = vadd.f32 %v198, 1e-08
        %v363 = vlog2.pop %v361
        %v364 = vmul.f32 %v363, 0.6931472
        %v365 = vlog2.pop %v362
        %v366 = vmul.f32 %v365, 0.6931472
        %v367 = vsub.f32 %v206, %v364
        %v368 = vsub.f32 %v208, %v366
        %v369 = vmul.f32 %v201, %v367
        %v370 = vmul.f32 %v202, %v368
        %v371 = vadd.f32 %v359, %v369
        %v372 = vadd.f32 %v360, %v370
        %v373 = vadd.f32 %v347, %v371
        %v374 = vadd.f32 %v348, %v372
        %vm375 = vcmp.ne.f32.partialorder %v373, %v373
        %vm376 = vcmp.ne.f32.partialorder %v374, %v374
        %v377 = vsel %vm375, inf, %v373
        %v378 = vsel %vm376, inf, %v374
        %v379 = vrot.slane %v377, 4
        %v380 = vadd.f32 %v377, %v379
        %v381 = vrot.slane %v380, 2
        %v382 = vadd.f32 %v380, %v381
        %v383 = vrot.slane %v382, 1
        %v384 = vadd.f32 %v382, %v383
        %v385 = vrot.slane %v378, 4
        %v386 = vadd.f32 %v378, %v385
        %v387 = vrot.slane %v386, 2
        %v388 = vadd.f32 %v386, %v387
        %v389 = vrot.slane %v388, 1
        %v390 = vadd.f32 %v388, %v389
        %v391 = vadd.f32 %v384, %v390
        %392 = vst [vmem:[%s196] sm:$0x1] %v391
        %s393 = sand.u32 %s82, 1
        %s394 = scalar_lea.sflag [#allocation4], %s393
        %s395 = sand.u32 %s82, 1
        %s396 = scalar_lea.vmem [#allocation7], %s395
        // Predicated region
        $region37: #{tpu_custom_call.1} parent=27 // pred_check
          %p397 = pneg %p92
        $region38: #{tpu_custom_call.1} parent=27 // pred_check_branch
          %399 = sbr.rel (%p397) target = $region40
        $region39: #{tpu_custom_call.1} parent=27 // pred_region
          %s401 = ssub.s32 16, 16
          %402 = vsyncadd %s394, %s401
          %s403 = smul.addr %s22, 16
          %s404 = scalar_lea.hbm %s2, %s403
          %s406 = sshll.u32 %s396, 4
          %s407 = int_to_ptr.vmem [resolvable:$true] %s406
          %409 = dma.vmem_to_hbm [thread:$0]  %s407, 16, %s404, %s394
        $region40: #{tpu_custom_call.1} parent=27 // pred_fallthru
          _
      $region28: #{tpu_custom_call.1} parent=5 // pred_fallthru
        _
      %p410 = scmp.le.s32.totalorder 2, %s17
      // Predicated region
      $region41: #{tpu_custom_call.1} parent=5 // pred_check
        %p411 = pneg %p410
      $region42: #{tpu_custom_call.1} parent=5 // pred_check_branch
        %413 = sbr.rel (%p411) target = $region44
      $region43: #{tpu_custom_call.1} parent=5 // pred_region
        %s414 = ssub.s32 %s17, 2
        // Predicated region
        $region45: #{tpu_custom_call.1} parent=43 // pred_check
          %p415 = pneg %p98
        $region46: #{tpu_custom_call.1} parent=43 // pred_check_branch
          %417 = sbr.rel (%p415) target = $region48
        $region47: #{tpu_custom_call.1} parent=43 // pred_region
          %s418 = sand.u32 %s83, 1
          %s419 = scalar_lea.sflag [#allocation4], %s418
          %s420 = sand.u32 %s83, 1
          %s421 = scalar_lea.vmem [#allocation7], %s420
          %422 = dma.done %s419, 16
        $region48: #{tpu_custom_call.1} parent=43 // pred_fallthru
          _
      $region44: #{tpu_custom_call.1} parent=5 // pred_fallthru
        _
    $region6: #{tpu_custom_call.1} parent=1 // loop_footer
      %s21 = sadd.s32 1, %s17
    $region7: #{tpu_custom_call.1} parent=1 // loop_footer_branch
      %16 = sbr.rel target = $region3
    $region8: #{tpu_custom_call.1} parent=1 // loop_exit
      _
    %423 = vsyncpa [#allocation3], 1
    %s424 = scalar_lea.sflag [#allocation3], 1
    %425 = vsyncpa %s424, 1
    %426 = vsyncpa [#allocation6], 1
    %s427 = scalar_lea.sflag [#allocation6], 1
    %428 = vsyncpa %s427, 1
    %429 = vsyncpa [#allocation4], 1
    %s430 = scalar_lea.sflag [#allocation4], 1
    %431 = vsyncpa %s430, 1

</llo_original>
